<compile_context>
chip_gen: v7x
topology: tpu7x:2x2x1
jax: 0.10.0
libtpu: 0.0.40
codegen_flags: <defaults>
</compile_context>

<pallas_src>
import numpy as np
import jax
import jax.numpy as jnp
from jax.experimental import pallas as pl
from jax.experimental.pallas import tpu as pltpu


def _packed_kernel(scal_ref, xp_ref, wsel_ref, usel_ref, out_ref, ld_ref):
    """Lane-packed planar-flow step.

    xp_ref   : (TILE_R, P*d)  P original rows packed per 128-lane vreg row
    wsel_ref : (P*d, P)       block-diagonal copy of w     (per-row dot product)
    usel_ref : (P, P*d)       block-diagonal copy of u_hat (broadcast tanh back)
    scal_ref : (2,) SMEM      [b, alpha] with alpha = w . u_hat
    out_ref  : (TILE_R, P*d)  lane-dense output tile
    ld_ref   : (TILE_R, P)    one log-det value per packed row
    """
    b = scal_ref[0]
    alpha = scal_ref[1]
    xp = xp_ref[...]
    # lin[r, g] = sum_k x[P*r + g, k] * w[k] + b   (MXU, otherwise idle here)
    lin = jnp.dot(xp, wsel_ref[...],
                  preferred_element_type=jnp.float32,
                  precision=jax.lax.Precision.HIGHEST) + b          # (TILE_R, P)
    h = jnp.tanh(lin)                                               # single tanh (EUP)
    # out[r, j] = x_packed[r, j] + h[r, j // d] * u_hat[j % d]
    out_ref[...] = xp + jnp.dot(h, usel_ref[...],
                                preferred_element_type=jnp.float32,
                                precision=jax.lax.Precision.HIGHEST)
    h_prime = 1.0 - h * h                                           # reuse h (no 2nd tanh)
    ld_ref[...] = jnp.log(jnp.abs(1.0 + alpha * h_prime))


def _rowwise_kernel(scal_ref, x_ref, w_ref, u_ref, out_ref, ld_ref):
    """Fallback for d that does not divide 128: one (TILE_N, d) block per grid step."""
    b = scal_ref[0]
    alpha = scal_ref[1]
    x = x_ref[...]
    lin = jnp.sum(x * w_ref[...], axis=-1, keepdims=True) + b       # (TILE_N, 1)
    h = jnp.tanh(lin)
    out_ref[...] = x + h * u_ref[...]
    h_prime = 1.0 - h * h
    # TODO(synk): log-det stays in a (TILE_N, 1) lane-sparse layout on this
    # fallback path; the packed path above is the lane-dense fast path.
    ld_ref[...] = jnp.log(jnp.abs(1.0 + alpha * h_prime))


def _forward_packed(x, w, u_hat, scalars, N, d):
    f32 = jnp.float32
    P = 128 // d                       # original rows packed per 128-lane vreg row
    lanes = P * d                      # == 128

    R = pl.cdiv(N, P)                  # packed rows
    TILE_R = int(min(1024, ((R + 7) // 8) * 8))   # 1024 packed rows = 512 KiB f32 block
    R_pad = pl.cdiv(R, TILE_R) * TILE_R
    N_pad = R_pad * P

    if N_pad != N:
        x = jnp.pad(x, ((0, N_pad - N), (0, 0)))
    xp = x.reshape(R_pad, lanes)       # free: contiguous row-major reshape

    # Block-diagonal selectors with w / u_hat folded in, so the kernel body is
    # just two matmuls + tanh + a few VPU ops.
    gmask = (np.arange(lanes) // d)[:, None] == np.arange(P)[None, :]      # (128, P)
    W_sel = jnp.where(gmask, jnp.tile(w.reshape(-1), P)[:, None], 0.0).astype(f32)
    U_sel = jnp.where(gmask.T, jnp.tile(u_hat.reshape(-1), P)[None, :], 0.0).astype(f32)

    out_p, ld_p = pl.pallas_call(
        _packed_kernel,
        out_shape=(jax.ShapeDtypeStruct((R_pad, lanes), f32),
                   jax.ShapeDtypeStruct((R_pad, P), f32)),
        grid=(R_pad // TILE_R,),
        in_specs=[
            pl.BlockSpec(memory_space=pltpu.MemorySpace.SMEM),      # [b, alpha]
            pl.BlockSpec((TILE_R, lanes), lambda i: (i, 0)),        # packed x
            pl.BlockSpec((lanes, P), lambda i: (0, 0)),             # W_sel (resident)
            pl.BlockSpec((P, lanes), lambda i: (0, 0)),             # U_sel (resident)
        ],
        out_specs=(
            pl.BlockSpec((TILE_R, lanes), lambda i: (i, 0)),
            pl.BlockSpec((TILE_R, P), lambda i: (i, 0)),
        ),
        compiler_params=pltpu.CompilerParams(dimension_semantics=("parallel",)),
        input_output_aliases={1: 0},                                # reuse x buffer for out
    )(scalars, xp, W_sel, U_sel)

    out = out_p.reshape(N_pad, d)[:N]
    logdet = ld_p.reshape(N_pad, 1)[:N]
    return out, logdet


def _forward_rowwise(x, w, u_hat, scalars, N, d):
    f32 = jnp.float32
    max_rows = max(8, (2 * 1024 * 1024) // (4 * d))                 # ~2 MiB x-block budget
    TILE_N = max(8, int(min(2048, (max_rows // 8) * 8, ((N + 7) // 8) * 8)))
    N_pad = pl.cdiv(N, TILE_N) * TILE_N
    if N_pad != N:
        x = jnp.pad(x, ((0, N_pad - N), (0, 0)))

    out, ld = pl.pallas_call(
        _rowwise_kernel,
        out_shape=(jax.ShapeDtypeStruct((N_pad, d), f32),
                   jax.ShapeDtypeStruct((N_pad, 1), f32)),
        grid=(N_pad // TILE_N,),
        in_specs=[
            pl.BlockSpec(memory_space=pltpu.MemorySpace.SMEM),      # [b, alpha]
            pl.BlockSpec((TILE_N, d), lambda i: (i, 0)),
            pl.BlockSpec((1, d), lambda i: (0, 0)),                 # w (resident)
            pl.BlockSpec((1, d), lambda i: (0, 0)),                 # u_hat (resident)
        ],
        out_specs=(
            pl.BlockSpec((TILE_N, d), lambda i: (i, 0)),
            pl.BlockSpec((TILE_N, 1), lambda i: (i, 0)),
        ),
        compiler_params=pltpu.CompilerParams(dimension_semantics=("parallel",)),
        input_output_aliases={1: 0},
    )(scalars, x, w, u_hat)
    return out[:N], ld[:N]


@jax.jit
def planar_flow_forward(x, w, u, b):
    """x: (N, d); w, u: (1, d); b: (1,). Returns (out (N, d), log_det_jacobian (N, 1))."""
    N, d = x.shape
    f32 = jnp.float32
    x = x.astype(f32)
    w = w.astype(f32).reshape(1, d)
    u = u.astype(f32).reshape(1, d)

    # u_hat invertibility correction (parameter-only scalar math -> plain JAX glue).
    wtu = jnp.sum(w * u)
    m_wtu = jax.nn.softplus(wtu) - 1.0          # == -1 + log1p(exp(wtu)), overflow-safe
    u_corr = u + (m_wtu - wtu) * w / jnp.sum(w * w)
    u_hat = jnp.where(wtu < 1.0, u_corr, u)

    # Hoisted scalars: bias and alpha = w @ u_hat.T -> kernel needs no reduce.
    alpha = jnp.sum(w * u_hat)
    scalars = jnp.stack([b.astype(f32).reshape(()), alpha]).astype(f32)    # (2,)

    if 0 < d <= 128 and 128 % d == 0:
        return _forward_packed(x, w, u_hat, scalars, N, d)
    return _forward_rowwise(x, w, u_hat, scalars, N, d)


def _reference(x, w, u, b):
    """Pure-JAX reference mirroring the PyTorch forward (elementwise, full f32)."""
    wtu = jnp.sum(w * u)
    m_wtu = -1.0 + jnp.log1p(jnp.exp(wtu))
    u_hat = jnp.where(wtu < 1.0, u + (m_wtu - wtu) * w / jnp.sum(w * w), u)
    lin = jnp.sum(x * w, axis=-1, keepdims=True) + b      # (N, 1)
    h = jnp.tanh(lin)
    out = x + h * u_hat
    logdet = jnp.log(jnp.abs(1.0 + (1.0 - h * h) * jnp.sum(w * u_hat)))
    return out, logdet


if __name__ == "__main__":
    key = jax.random.PRNGKey(0)

    def make_inputs(k, N, d):
        kx, kw, ku, kb = jax.random.split(k, 4)
        bound = float(np.sqrt(1.0 / d))
        w = jax.random.uniform(kw, (1, d), jnp.float32, -bound, bound)
        u = jax.random.uniform(ku, (1, d), jnp.float32, -bound, bound)
        b = jax.random.uniform(kb, (1,), jnp.float32, -bound, bound)
        x = jax.random.normal(kx, (N, d), jnp.float32)
        return x, w, u, b

    k1, k2 = jax.random.split(key)

    # Lane-packed fast path: d divides 128.
    x, w, u, b = make_inputs(k1, 8, 32)
    out, logdet = planar_flow_forward(x, w, u, b)
    out = jax.block_until_ready(out)
    logdet = jax.block_until_ready(logdet)
    ref_out, ref_ld = _reference(x, w, u, b)
    np.testing.assert_allclose(np.asarray(out), np.asarray(ref_out), rtol=1e-4, atol=1e-4)
    np.testing.assert_allclose(np.asarray(logdet), np.asarray(ref_ld), rtol=1e-4, atol=1e-4)

    # Generic row-wise fallback path: d does not divide 128.
    x2, w2, u2, b2 = make_inputs(k2, 16, 48)
    out2, logdet2 = planar_flow_forward(x2, w2, u2, b2)
    out2 = jax.block_until_ready(out2)
    logdet2 = jax.block_until_ready(logdet2)
    ref_out2, ref_ld2 = _reference(x2, w2, u2, b2)
    np.testing.assert_allclose(np.asarray(out2), np.asarray(ref_out2), rtol=1e-4, atol=1e-4)
    np.testing.assert_allclose(np.asarray(logdet2), np.asarray(ref_ld2), rtol=1e-4, atol=1e-4)

    print("KERNEL_OK")
</pallas_src>

<mosaic_0001>
module attributes {stable_mosaic.version = 11 : i64} {
  func.func @_packed_kernel(%arg0: i32, %arg1: memref<2xf32, #tpu.memory_space<smem>>, %arg2: memref<8x128xf32, #tpu.memory_space<vmem>>, %arg3: memref<128x4xf32, #tpu.memory_space<vmem>>, %arg4: memref<4x128xf32, #tpu.memory_space<vmem>>, %arg5: memref<8x128xf32, #tpu.memory_space<vmem>>, %arg6: memref<8x4xf32, #tpu.memory_space<vmem>>) attributes {dimension_semantics = [#tpu.dimension_semantics<parallel>], iteration_bounds = array<i64: 1>, scalar_prefetch = 0 : i64, scratch_operands = 0 : i64, tpu.core_type = #tpu.core_type<tc>, window_params = [{transform_indices = @transform_0, window_bounds = array<i64: 2>}, {transform_indices = @transform_1, window_bounds = array<i64: 8, 128>}, {pipeline_mode = #tpu.pipeline_mode<synchronous>, transform_indices = @transform_2, window_bounds = array<i64: 128, 4>}, {pipeline_mode = #tpu.pipeline_mode<synchronous>, transform_indices = @transform_3, window_bounds = array<i64: 4, 128>}, {transform_indices = @transform_4, window_bounds = array<i64: 8, 128>}, {transform_indices = @transform_5, window_bounds = array<i64: 8, 4>}]} {
    %c0 = arith.constant 0 : index
    %0 = memref.load %arg1[%c0] : memref<2xf32, #tpu.memory_space<smem>>
    %c1 = arith.constant 1 : index
    %1 = memref.load %arg1[%c1] : memref<2xf32, #tpu.memory_space<smem>>
    %c0_0 = arith.constant 0 : index
    %c0_1 = arith.constant 0 : index
    %2 = vector.load %arg2[%c0_0, %c0_1] : memref<8x128xf32, #tpu.memory_space<vmem>>, vector<8x128xf32>
    %c0_2 = arith.constant 0 : index
    %c0_3 = arith.constant 0 : index
    %3 = vector.load %arg3[%c0_2, %c0_3] : memref<128x4xf32, #tpu.memory_space<vmem>>, vector<128x4xf32>
    %cst = arith.constant dense<0.000000e+00> : vector<8x4xf32>
    %4 = tpu.matmul %2, %3, %cst {dimension_numbers = #tpu.dot_dimension_numbers<[1], [0], [0], [1], [0, 0, 1, 1], [], []>, precision = #tpu.contract_precision<fp32>} : vector<8x128xf32>, vector<128x4xf32>, vector<8x4xf32> -> vector<8x4xf32>
    %5 = vector.broadcast %0 : f32 to vector<8x4xf32>
    %6 = arith.addf %4, %5 : vector<8x4xf32>
    %7 = math.tanh %6 : vector<8x4xf32>
    %c0_4 = arith.constant 0 : index
    %c0_5 = arith.constant 0 : index
    %8 = vector.load %arg4[%c0_4, %c0_5] : memref<4x128xf32, #tpu.memory_space<vmem>>, vector<4x128xf32>
    %cst_6 = arith.constant dense<0.000000e+00> : vector<8x128xf32>
    %9 = tpu.matmul %7, %8, %cst_6 {dimension_numbers = #tpu.dot_dimension_numbers<[1], [0], [0], [1], [0, 0, 1, 1], [], []>, precision = #tpu.contract_precision<fp32>} : vector<8x4xf32>, vector<4x128xf32>, vector<8x128xf32> -> vector<8x128xf32>
    %10 = arith.addf %2, %9 : vector<8x128xf32>
    %c0_7 = arith.constant 0 : index
    %c0_8 = arith.constant 0 : index
    %11 = vector.load %arg5[%c0_7, %c0_8] : memref<8x128xf32, #tpu.memory_space<vmem>>, vector<8x128xf32>
    tpu.vector_store %arg5[%c0_7, %c0_8], %10 {strides = array<i32>} : memref<8x128xf32, #tpu.memory_space<vmem>>, vector<8x128xf32>,
    %12 = arith.mulf %7, %7 : vector<8x4xf32>
    %cst_9 = arith.constant 1.000000e+00 : f32
    %13 = vector.broadcast %cst_9 : f32 to vector<8x4xf32>
    %14 = arith.subf %13, %12 : vector<8x4xf32>
    %15 = vector.broadcast %1 : f32 to vector<8x4xf32>
    %16 = arith.mulf %15, %14 : vector<8x4xf32>
    %cst_10 = arith.constant 1.000000e+00 : f32
    %17 = vector.broadcast %cst_10 : f32 to vector<8x4xf32>
    %18 = arith.addf %17, %16 : vector<8x4xf32>
    %19 = math.absf %18 : vector<8x4xf32>
    %20 = math.log %19 : vector<8x4xf32>
    %c0_11 = arith.constant 0 : index
    %c0_12 = arith.constant 0 : index
    %21 = vector.load %arg6[%c0_11, %c0_12] : memref<8x4xf32, #tpu.memory_space<vmem>>, vector<8x4xf32>
    tpu.vector_store %arg6[%c0_11, %c0_12], %20 {strides = array<i32>} : memref<8x4xf32, #tpu.memory_space<vmem>>, vector<8x4xf32>,
    return
  }
  func.func @transform_0(%arg0: i32) -> i32 {
    %c0_i32 = arith.constant 0 : i32
    %c0_i32_0 = arith.constant 0 : i32
    return %c0_i32 : i32
  }
  func.func @transform_1(%arg0: i32) -> (i32, i32) {
    %c0_i32 = arith.constant 0 : i32
    %c0_i32_0 = arith.constant 0 : i32
    return %arg0, %c0_i32 : i32, i32
  }
  func.func @transform_2(%arg0: i32) -> (i32, i32) {
    %c0_i32 = arith.constant 0 : i32
    %c0_i32_0 = arith.constant 0 : i32
    %c0_i32_1 = arith.constant 0 : i32
    return %c0_i32, %c0_i32_0 : i32, i32
  }
  func.func @transform_3(%arg0: i32) -> (i32, i32) {
    %c0_i32 = arith.constant 0 : i32
    %c0_i32_0 = arith.constant 0 : i32
    %c0_i32_1 = arith.constant 0 : i32
    return %c0_i32, %c0_i32_0 : i32, i32
  }
  func.func @transform_4(%arg0: i32) -> (i32, i32) {
    %c0_i32 = arith.constant 0 : i32
    %c0_i32_0 = arith.constant 0 : i32
    return %arg0, %c0_i32 : i32, i32
  }
  func.func @transform_5(%arg0: i32) -> (i32, i32) {
    %c0_i32 = arith.constant 0 : i32
    %c0_i32_0 = arith.constant 0 : i32
    return %arg0, %c0_i32 : i32, i32
  }
}

</mosaic_0001>

<llo_original>
// kernel: tile.14
$region0: #{tile.14}
  #allocation0 [shape = 's32[1]{0}', space=sflag, size = 0x4, scoped, tag = 'scoped memory for tile.14']
  %s0 = inlined_call_operand.vmem [shape: f32[32], index: 0, kind: input, shape index: {}]
  %s1 = inlined_call_operand.vmem [shape: f32[4,32], index: 1, kind: output, shape index: {}]
  // Predicated region
  $region2: #{tile.14} parent=0 // pred_check
    _
  $region3: #{tile.14} parent=0 // pred_check_branch
    %3 = sbr.rel (0) target = $region5
  $region4: #{tile.14} parent=0 // pred_region
    _
  $region5: #{tile.14} parent=0 // pred_fallthru
    _
  %v4 = vld [vmem:[%s0] ss:$0 sm:$0xff]
  %5 = vst [vmem:[%s1] sm:$0xf] %v4

// kernel: planar_flow_forward.1
$region0: #{planar_flow_forward.1}
  #allocation0 [shape = 'u32[]', space=smem, size = 0x4, offset = 0x4, fixed_abs, tag = 'smem constant byte address 0x4 - core index']
  #allocation1 [shape = 'u32[144,128]{1,0:T(1,128)}', space=vmem, size = 0x12000, scoped, tag = 'internal scratch']
  %s0 = inlined_call_operand.vmem [shape: f32[2], index: 0, kind: input, shape index: {}]
  %s1 = inlined_call_operand.vmem [shape: f32[8,128], index: 1, kind: input, shape index: {}, may-alias: {1,4}]
  %s2 = inlined_call_operand.vmem [shape: f32[128,4], index: 2, kind: input, shape index: {}]
  %s3 = inlined_call_operand.vmem [shape: f32[4,128], index: 3, kind: input, shape index: {}]
  %s4 = inlined_call_operand.vmem [shape: f32[8,128], index: 4, kind: output, shape index: {0}, may-alias: {1,4}]
  %s5 = inlined_call_operand.vmem [shape: f32[8,4], index: 5, kind: output, shape index: {1}]
  %6 = xla_tuple %s4, %s5
  %s7 = sld [smem:[#allocation0]]
  $region38: #{planar_flow_forward.1} parent=0
    _
  %s9 = ssub.s32 1, %s7
  %s10 = scalar_select 0, %s9, %s7
  $region1: #{planar_flow_forward.1} parent=0
    #allocation2 [shape = 'u8[512]{0}', space=smem, size = 0x200, scoped, tag = 'input window, operand 0, single buffered']
    #allocation3 [shape = 's32[1]{0}', space=sflag, size = 0x4, scoped, tag = 'scoped memory for planar_flow_forward.1']
    %11 = vsyncpa [#allocation3], 0
    // Predicated region
    $region2: #{planar_flow_forward.1} parent=1 // pred_check
      _
    $region3: #{planar_flow_forward.1} parent=1 // pred_check_branch
      %13 = sbr.rel (0) target = $region5
    $region4: #{planar_flow_forward.1} parent=1 // pred_region
      %s15 = ssub.s32 16, 16
      %16 = vsyncadd [#allocation3], %s15
      %s18 = sshll.u32 %s0, 4
      %s19 = int_to_ptr.vmem [resolvable:$true] %s18
      %21 = dma.vmem_to_smem %s19, 16, [#allocation2], [#allocation3]
    $region5: #{planar_flow_forward.1} parent=1 // pred_fallthru
      _
    // Predicated region
    $region6: #{planar_flow_forward.1} parent=1 // pred_check
      _
    $region7: #{planar_flow_forward.1} parent=1 // pred_check_branch
      %23 = sbr.rel (0) target = $region9
    $region8: #{planar_flow_forward.1} parent=1 // pred_region
      _
    $region9: #{planar_flow_forward.1} parent=1 // pred_fallthru
      _
    // Predicated region
    $region10: #{planar_flow_forward.1} parent=1 // pred_check
      _
    $region11: #{planar_flow_forward.1} parent=1 // pred_check_branch
      %25 = sbr.rel (0) target = $region13
    $region12: #{planar_flow_forward.1} parent=1 // pred_region
      _
    $region13: #{planar_flow_forward.1} parent=1 // pred_fallthru
      _
    // Predicated region
    $region14: #{planar_flow_forward.1} parent=1 // pred_check
      _
    $region15: #{planar_flow_forward.1} parent=1 // pred_check_branch
      %27 = sbr.rel (0) target = $region17
    $region16: #{planar_flow_forward.1} parent=1 // pred_region
      _
    $region17: #{planar_flow_forward.1} parent=1 // pred_fallthru
      _
    // Predicated region
    $region18: #{planar_flow_forward.1} parent=1 // pred_check
      _
    $region19: #{planar_flow_forward.1} parent=1 // pred_check_branch
      %29 = sbr.rel (0) target = $region21
    $region20: #{planar_flow_forward.1} parent=1 // pred_region
      %30 = dma.done [#allocation3], 16
    $region21: #{planar_flow_forward.1} parent=1 // pred_fallthru
      _
    %31 = sfence
    %s32 = sld [smem:[#allocation2]]
    %s33 = sld [smem:[#allocation2 + $0x1]]
    %v34 = vld [vmem:[%s1] sm:$0xff]
    %v35 = vld [vmem:[%s2] sm:$0xff]
    %v36 = vld [vmem:[%s2 + $0x8] sm:$0xff]
    %v37 = vld [vmem:[%s2 + $0x10] sm:$0xff]
    %v38 = vld [vmem:[%s2 + $0x18] sm:$0xff]
    %v39 = vld [vmem:[%s2 + $0x20] sm:$0xff]
    %v40 = vld [vmem:[%s2 + $0x28] sm:$0xff]
    %v41 = vld [vmem:[%s2 + $0x30] sm:$0xff]
    %v42 = vld [vmem:[%s2 + $0x38] sm:$0xff]
    %v43 = vld [vmem:[%s2 + $0x40] sm:$0xff]
    %v44 = vld [vmem:[%s2 + $0x48] sm:$0xff]
    %v45 = vld [vmem:[%s2 + $0x50] sm:$0xff]
    %v46 = vld [vmem:[%s2 + $0x58] sm:$0xff]
    %v47 = vld [vmem:[%s2 + $0x60] sm:$0xff]
    %v48 = vld [vmem:[%s2 + $0x68] sm:$0xff]
    %v49 = vld [vmem:[%s2 + $0x70] sm:$0xff]
    %v50 = vld [vmem:[%s2 + $0x78] sm:$0xff]
    %v51 = vstv %s32
    %52 = vmatprep.subr.mxu0 0.0
    %v53 = vand.u32 %v35, 4294901760
    %54 = vmatpush1.msra.mxu0 %v53
    %55 = vmatprep.subr.mxu0 0.0
    %v56 = vand.u32 %v36, 4294901760
    %57 = vmatpush1.msra.mxu0 %v56
    %58 = vmatprep.subr.mxu0 0.0
    %v59 = vand.u32 %v37, 4294901760
    %60 = vmatpush1.msra.mxu0 %v59
    %61 = vmatprep.subr.mxu0 0.0
    %v62 = vand.u32 %v38, 4294901760
    %63 = vmatpush1.msra.mxu0 %v62
    %64 = vmatprep.subr.mxu0 0.0
    %v65 = vand.u32 %v39, 4294901760
    %66 = vmatpush1.msra.mxu0 %v65
    %67 = vmatprep.subr.mxu0 0.0
    %v68 = vand.u32 %v40, 4294901760
    %69 = vmatpush1.msra.mxu0 %v68
    %70 = vmatprep.subr.mxu0 0.0
    %v71 = vand.u32 %v41, 4294901760
    %72 = vmatpush1.msra.mxu0 %v71
    %73 = vmatprep.subr.mxu0 0.0
    %v74 = vand.u32 %v42, 4294901760
    %75 = vmatpush1.msra.mxu0 %v74
    %76 = vmatprep.subr.mxu0 0.0
    %v77 = vand.u32 %v43, 4294901760
    %78 = vmatpush1.msra.mxu0 %v77
    %79 = vmatprep.subr.mxu0 0.0
    %v80 = vand.u32 %v44, 4294901760
    %81 = vmatpush1.msra.mxu0 %v80
    %82 = vmatprep.subr.mxu0 0.0
    %v83 = vand.u32 %v45, 4294901760
    %84 = vmatpush1.msra.mxu0 %v83
    %85 = vmatprep.subr.mxu0 0.0
    %v86 = vand.u32 %v46, 4294901760
    %87 = vmatpush1.msra.mxu0 %v86
    %88 = vmatprep.subr.mxu0 0.0
    %v89 = vand.u32 %v47, 4294901760
    %90 = vmatpush1.msra.mxu0 %v89
    %91 = vmatprep.subr.mxu0 0.0
    %v92 = vand.u32 %v48, 4294901760
    %93 = vmatpush1.msra.mxu0 %v92
    %94 = vmatprep.subr.mxu0 0.0
    %v95 = vand.u32 %v49, 4294901760
    %96 = vmatpush1.msra.mxu0 %v95
    %97 = vmatprep.subr.mxu0 0.0
    %v98 = vand.u32 %v50, 4294901760
    %99 = vmatpush1.msra.mxu0 %v98
    %100 = vmatprep.subr.mxu0 0.0
    %101 = vmatpush1.msra.mxu0 0.0
    %102 = vmatprep.subr.mxu0 0.0
    %103 = vmatpush1.msra.mxu0 0.0
    %104 = vmatprep.subr.mxu0 0.0
    %105 = vmatpush1.msra.mxu0 0.0
    %106 = vmatprep.subr.mxu0 0.0
    %107 = vmatpush1.msra.mxu0 0.0
    %108 = vmatprep.subr.mxu0 0.0
    %109 = vmatpush1.msra.mxu0 0.0
    %110 = vmatprep.subr.mxu0 0.0
    %111 = vmatpush1.msra.mxu0 0.0
    %112 = vmatprep.subr.mxu0 0.0
    %113 = vmatpush1.msra.mxu0 0.0
    %114 = vmatprep.subr.mxu0 0.0
    %115 = vmatpush1.msra.mxu0 0.0
    %116 = vmatprep.subr.mxu0 0.0
    %117 = vmatpush1.msra.mxu0 0.0
    %118 = vmatprep.subr.mxu0 0.0
    %119 = vmatpush1.msra.mxu0 0.0
    %120 = vmatprep.subr.mxu0 0.0
    %121 = vmatpush1.msra.mxu0 0.0
    %122 = vmatprep.subr.mxu0 0.0
    %123 = vmatpush1.msra.mxu0 0.0
    %124 = vmatprep.subr.mxu0 0.0
    %125 = vmatpush1.msra.mxu0 0.0
    %126 = vmatprep.subr.mxu0 0.0
    %127 = vmatpush1.msra.mxu0 0.0
    %128 = vmatprep.subr.mxu0 0.0
    %129 = vmatpush1.msra.mxu0 0.0
    %130 = vmatprep.subr.mxu0 0.0
    %131 = vmatpush1.msra.mxu0 0.0
    %132 = vmatprep.mubr.f32.mxu0 0.0
    %v133 = vand.u32 %v34, 4294901760
    %v134 = vsub.f32 %v34, %v133
    %v135 = vand.u32 %v134, 4294901760
    %v136 = vsub.f32 %v134, %v135
    %v137 = vand.u32 %v136, 4294901760
    %138 = vmatmul.mubr.f32.gmra.mrb[0].mxu0 %v137
    %v139 = vpop.f32.mrb[0].mxu0
    %v140 = vadd.f32 %v51, %v139
    %v141 = vpop.f32.mrb[0].mxu0
    %142 = vdwg.mxu0
    %143 = vmatprep.subr.mxu0 0.0
    %v144 = vand.u32 %v35, 4294901760
    %v145 = vsub.f32 %v35, %v144
    %v146 = vand.u32 %v145, 4294901760
    %v147 = vsub.f32 %v145, %v146
    %v148 = vand.u32 %v147, 4294901760
    %149 = vmatpush1.msra.mxu0 %v148
    %150 = vmatprep.subr.mxu0 0.0
    %v151 = vand.u32 %v36, 4294901760
    %v152 = vsub.f32 %v36, %v151
    %v153 = vand.u32 %v152, 4294901760
    %v154 = vsub.f32 %v152, %v153
    %v155 = vand.u32 %v154, 4294901760
    %156 = vmatpush1.msra.mxu0 %v155
    %157 = vmatprep.subr.mxu0 0.0
    %v158 = vand.u32 %v37, 4294901760
    %v159 = vsub.f32 %v37, %v158
    %v160 = vand.u32 %v159, 4294901760
    %v161 = vsub.f32 %v159, %v160
    %v162 = vand.u32 %v161, 4294901760
    %163 = vmatpush1.msra.mxu0 %v162
    %164 = vmatprep.subr.mxu0 0.0
    %v165 = vand.u32 %v38, 4294901760
    %v166 = vsub.f32 %v38, %v165
    %v167 = vand.u32 %v166, 4294901760
    %v168 = vsub.f32 %v166, %v167
    %v169 = vand.u32 %v168, 4294901760
    %170 = vmatpush1.msra.mxu0 %v169
    %171 = vmatprep.subr.mxu0 0.0
    %v172 = vand.u32 %v39, 4294901760
    %v173 = vsub.f32 %v39, %v172
    %v174 = vand.u32 %v173, 4294901760
    %v175 = vsub.f32 %v173, %v174
    %v176 = vand.u32 %v175, 4294901760
    %177 = vmatpush1.msra.mxu0 %v176
    %178 = vmatprep.subr.mxu0 0.0
    %v179 = vand.u32 %v40, 4294901760
    %v180 = vsub.f32 %v40, %v179
    %v181 = vand.u32 %v180, 4294901760
    %v182 = vsub.f32 %v180, %v181
    %v183 = vand.u32 %v182, 4294901760
    %184 = vmatpush1.msra.mxu0 %v183
    %185 = vmatprep.subr.mxu0 0.0
    %v186 = vand.u32 %v41, 4294901760
    %v187 = vsub.f32 %v41, %v186
    %v188 = vand.u32 %v187, 4294901760
    %v189 = vsub.f32 %v187, %v188
    %v190 = vand.u32 %v189, 4294901760
    %191 = vmatpush1.msra.mxu0 %v190
    %192 = vmatprep.subr.mxu0 0.0
    %v193 = vand.u32 %v42, 4294901760
    %v194 = vsub.f32 %v42, %v193
    %v195 = vand.u32 %v194, 4294901760
    %v196 = vsub.f32 %v194, %v195
    %v197 = vand.u32 %v196, 4294901760
    %198 = vmatpush1.msra.mxu0 %v197
    %199 = vmatprep.subr.mxu0 0.0
    %v200 = vand.u32 %v43, 4294901760
    %v201 = vsub.f32 %v43, %v200
    %v202 = vand.u32 %v201, 4294901760
    %v203 = vsub.f32 %v201, %v202
    %v204 = vand.u32 %v203, 4294901760
    %205 = vmatpush1.msra.mxu0 %v204
    %206 = vmatprep.subr.mxu0 0.0
    %v207 = vand.u32 %v44, 4294901760
    %v208 = vsub.f32 %v44, %v207
    %v209 = vand.u32 %v208, 4294901760
    %v210 = vsub.f32 %v208, %v209
    %v211 = vand.u32 %v210, 4294901760
    %212 = vmatpush1.msra.mxu0 %v211
    %213 = vmatprep.subr.mxu0 0.0
    %v214 = vand.u32 %v45, 4294901760
    %v215 = vsub.f32 %v45, %v214
    %v216 = vand.u32 %v215, 4294901760
    %v217 = vsub.f32 %v215, %v216
    %v218 = vand.u32 %v217, 4294901760
    %219 = vmatpush1.msra.mxu0 %v218
    %220 = vmatprep.subr.mxu0 0.0
    %v221 = vand.u32 %v46, 4294901760
    %v222 = vsub.f32 %v46, %v221
    %v223 = vand.u32 %v222, 4294901760
    %v224 = vsub.f32 %v222, %v223
    %v225 = vand.u32 %v224, 4294901760
    %226 = vmatpush1.msra.mxu0 %v225
    %227 = vmatprep.subr.mxu0 0.0
    %v228 = vand.u32 %v47, 4294901760
    %v229 = vsub.f32 %v47, %v228
    %v230 = vand.u32 %v229, 4294901760
    %v231 = vsub.f32 %v229, %v230
    %v232 = vand.u32 %v231, 4294901760
    %233 = vmatpush1.msra.mxu0 %v232
    %234 = vmatprep.subr.mxu0 0.0
    %v235 = vand.u32 %v48, 4294901760
    %v236 = vsub.f32 %v48, %v235
    %v237 = vand.u32 %v236, 4294901760
    %v238 = vsub.f32 %v236, %v237
    %v239 = vand.u32 %v238, 4294901760
    %240 = vmatpush1.msra.mxu0 %v239
    %241 = vmatprep.subr.mxu0 0.0
    %v242 = vand.u32 %v49, 4294901760
    %v243 = vsub.f32 %v49, %v242
    %v244 = vand.u32 %v243, 4294901760
    %v245 = vsub.f32 %v243, %v244
    %v246 = vand.u32 %v245, 4294901760
    %247 = vmatpush1.msra.mxu0 %v246
    %248 = vmatprep.subr.mxu0 0.0
    %v249 = vand.u32 %v50, 4294901760
    %v250 = vsub.f32 %v50, %v249
    %v251 = vand.u32 %v250, 4294901760
    %v252 = vsub.f32 %v250, %v251
    %v253 = vand.u32 %v252, 4294901760
    %254 = vmatpush1.msra.mxu0 %v253
    %255 = vmatprep.subr.mxu0 0.0
    %256 = vmatpush1.msra.mxu0 0.0
    %257 = vmatprep.subr.mxu0 0.0
    %258 = vmatpush1.msra.mxu0 0.0
    %259 = vmatprep.subr.mxu0 0.0
    %260 = vmatpush1.msra.mxu0 0.0
    %261 = vmatprep.subr.mxu0 0.0
    %262 = vmatpush1.msra.mxu0 0.0
    %263 = vmatprep.subr.mxu0 0.0
    %264 = vmatpush1.msra.mxu0 0.0
    %265 = vmatprep.subr.mxu0 0.0
    %266 = vmatpush1.msra.mxu0 0.0
    %267 = vmatprep.subr.mxu0 0.0
    %268 = vmatpush1.msra.mxu0 0.0
    %269 = vmatprep.subr.mxu0 0.0
    %270 = vmatpush1.msra.mxu0 0.0
    %271 = vmatprep.subr.mxu0 0.0
    %272 = vmatpush1.msra.mxu0 0.0
    %273 = vmatprep.subr.mxu0 0.0
    %274 = vmatpush1.msra.mxu0 0.0
    %275 = vmatprep.subr.mxu0 0.0
    %276 = vmatpush1.msra.mxu0 0.0
    %277 = vmatprep.subr.mxu0 0.0
    %278 = vmatpush1.msra.mxu0 0.0
    %279 = vmatprep.subr.mxu0 0.0
    %280 = vmatpush1.msra.mxu0 0.0
    %281 = vmatprep.subr.mxu0 0.0
    %282 = vmatpush1.msra.mxu0 0.0
    %283 = vmatprep.subr.mxu0 0.0
    %284 = vmatpush1.msra.mxu0 0.0
    %285 = vmatprep.subr.mxu0 0.0
    %286 = vmatpush1.msra.mxu0 0.0
    %287 = vmatprep.mubr.f32.mxu0 0.0
    %v288 = vand.u32 %v34, 4294901760
    %289 = vmatmul.mubr.f32.gmra.mrb[0].mxu0 %v288
    %v290 = vpop.f32.mrb[0].mxu0
    %v291 = vadd.f32 %v140, %v290
    %v292 = vpop.f32.mrb[0].mxu0
    %293 = vdwg.mxu0
    %294 = vmatprep.subr.mxu0 0.0
    %v295 = vand.u32 %v35, 4294901760
    %v296 = vsub.f32 %v35, %v295
    %297 = vmatpush1.msra.mxu0 %v296
    %298 = vmatprep.subr.mxu0 0.0
    %v299 = vand.u32 %v36, 4294901760
    %v300 = vsub.f32 %v36, %v299
    %301 = vmatpush1.msra.mxu0 %v300
    %302 = vmatprep.subr.mxu0 0.0
    %v303 = vand.u32 %v37, 4294901760
    %v304 = vsub.f32 %v37, %v303
    %305 = vmatpush1.msra.mxu0 %v304
    %306 = vmatprep.subr.mxu0 0.0
    %v307 = vand.u32 %v38, 4294901760
    %v308 = vsub.f32 %v38, %v307
    %309 = vmatpush1.msra.mxu0 %v308
    %310 = vmatprep.subr.mxu0 0.0
    %v311 = vand.u32 %v39, 4294901760
    %v312 = vsub.f32 %v39, %v311
    %313 = vmatpush1.msra.mxu0 %v312
    %314 = vmatprep.subr.mxu0 0.0
    %v315 = vand.u32 %v40, 4294901760
    %v316 = vsub.f32 %v40, %v315
    %317 = vmatpush1.msra.mxu0 %v316
    %318 = vmatprep.subr.mxu0 0.0
    %v319 = vand.u32 %v41, 4294901760
    %v320 = vsub.f32 %v41, %v319
    %321 = vmatpush1.msra.mxu0 %v320
    %322 = vmatprep.subr.mxu0 0.0
    %v323 = vand.u32 %v42, 4294901760
    %v324 = vsub.f32 %v42, %v323
    %325 = vmatpush1.msra.mxu0 %v324
    %326 = vmatprep.subr.mxu0 0.0
    %v327 = vand.u32 %v43, 4294901760
    %v328 = vsub.f32 %v43, %v327
    %329 = vmatpush1.msra.mxu0 %v328
    %330 = vmatprep.subr.mxu0 0.0
    %v331 = vand.u32 %v44, 4294901760
    %v332 = vsub.f32 %v44, %v331
    %333 = vmatpush1.msra.mxu0 %v332
    %334 = vmatprep.subr.mxu0 0.0
    %v335 = vand.u32 %v45, 4294901760
    %v336 = vsub.f32 %v45, %v335
    %337 = vmatpush1.msra.mxu0 %v336
    %338 = vmatprep.subr.mxu0 0.0
    %v339 = vand.u32 %v46, 4294901760
    %v340 = vsub.f32 %v46, %v339
    %341 = vmatpush1.msra.mxu0 %v340
    %342 = vmatprep.subr.mxu0 0.0
    %v343 = vand.u32 %v47, 4294901760
    %v344 = vsub.f32 %v47, %v343
    %345 = vmatpush1.msra.mxu0 %v344
    %346 = vmatprep.subr.mxu0 0.0
    %v347 = vand.u32 %v48, 4294901760
    %v348 = vsub.f32 %v48, %v347
    %349 = vmatpush1.msra.mxu0 %v348
    %350 = vmatprep.subr.mxu0 0.0
    %v351 = vand.u32 %v49, 4294901760
    %v352 = vsub.f32 %v49, %v351
    %353 = vmatpush1.msra.mxu0 %v352
    %354 = vmatprep.subr.mxu0 0.0
    %v355 = vand.u32 %v50, 4294901760
    %v356 = vsub.f32 %v50, %v355
    %357 = vmatpush1.msra.mxu0 %v356
    %358 = vmatprep.subr.mxu0 0.0
    %359 = vmatpush1.msra.mxu0 0.0
    %360 = vmatprep.subr.mxu0 0.0
    %361 = vmatpush1.msra.mxu0 0.0
    %362 = vmatprep.subr.mxu0 0.0
    %363 = vmatpush1.msra.mxu0 0.0
    %364 = vmatprep.subr.mxu0 0.0
    %365 = vmatpush1.msra.mxu0 0.0
    %366 = vmatprep.subr.mxu0 0.0
    %367 = vmatpush1.msra.mxu0 0.0
    %368 = vmatprep.subr.mxu0 0.0
    %369 = vmatpush1.msra.mxu0 0.0
    %370 = vmatprep.subr.mxu0 0.0
    %371 = vmatpush1.msra.mxu0 0.0
    %372 = vmatprep.subr.mxu0 0.0
    %373 = vmatpush1.msra.mxu0 0.0
    %374 = vmatprep.subr.mxu0 0.0
    %375 = vmatpush1.msra.mxu0 0.0
    %376 = vmatprep.subr.mxu0 0.0
    %377 = vmatpush1.msra.mxu0 0.0
    %378 = vmatprep.subr.mxu0 0.0
    %379 = vmatpush1.msra.mxu0 0.0
    %380 = vmatprep.subr.mxu0 0.0
    %381 = vmatpush1.msra.mxu0 0.0
    %382 = vmatprep.subr.mxu0 0.0
    %383 = vmatpush1.msra.mxu0 0.0
    %384 = vmatprep.subr.mxu0 0.0
    %385 = vmatpush1.msra.mxu0 0.0
    %386 = vmatprep.subr.mxu0 0.0
    %387 = vmatpush1.msra.mxu0 0.0
    %388 = vmatprep.subr.mxu0 0.0
    %389 = vmatpush1.msra.mxu0 0.0
    %390 = vmatprep.mubr.f32.mxu0 0.0
    %v391 = vand.u32 %v34, 4294901760
    %v392 = vsub.f32 %v34, %v391
    %393 = vmatmul.mubr.f32.gmra.mrb[0].mxu0 %v392
    %v394 = vpop.f32.mrb[0].mxu0
    %v395 = vadd.f32 %v291, %v394
    %v396 = vpop.f32.mrb[0].mxu0
    %397 = vdwg.mxu0
    %398 = vmatprep.subr.mxu0 0.0
    %v399 = vand.u32 %v35, 4294901760
    %400 = vmatpush1.msra.mxu0 %v399
    %401 = vmatprep.subr.mxu0 0.0
    %v402 = vand.u32 %v36, 4294901760
    %403 = vmatpush1.msra.mxu0 %v402
    %404 = vmatprep.subr.mxu0 0.0
    %v405 = vand.u32 %v37, 4294901760
    %406 = vmatpush1.msra.mxu0 %v405
    %407 = vmatprep.subr.mxu0 0.0
    %v408 = vand.u32 %v38, 4294901760
    %409 = vmatpush1.msra.mxu0 %v408
    %410 = vmatprep.subr.mxu0 0.0
    %v411 = vand.u32 %v39, 4294901760
    %412 = vmatpush1.msra.mxu0 %v411
    %413 = vmatprep.subr.mxu0 0.0
    %v414 = vand.u32 %v40, 4294901760
    %415 = vmatpush1.msra.mxu0 %v414
    %416 = vmatprep.subr.mxu0 0.0
    %v417 = vand.u32 %v41, 4294901760
    %418 = vmatpush1.msra.mxu0 %v417
    %419 = vmatprep.subr.mxu0 0.0
    %v420 = vand.u32 %v42, 4294901760
    %421 = vmatpush1.msra.mxu0 %v420
    %422 = vmatprep.subr.mxu0 0.0
    %v423 = vand.u32 %v43, 4294901760
    %424 = vmatpush1.msra.mxu0 %v423
    %425 = vmatprep.subr.mxu0 0.0
    %v426 = vand.u32 %v44, 4294901760
    %427 = vmatpush1.msra.mxu0 %v426
    %428 = vmatprep.subr.mxu0 0.0
    %v429 = vand.u32 %v45, 4294901760
    %430 = vmatpush1.msra.mxu0 %v429
    %431 = vmatprep.subr.mxu0 0.0
    %v432 = vand.u32 %v46, 4294901760
    %433 = vmatpush1.msra.mxu0 %v432
    %434 = vmatprep.subr.mxu0 0.0
    %v435 = vand.u32 %v47, 4294901760
    %436 = vmatpush1.msra.mxu0 %v435
    %437 = vmatprep.subr.mxu0 0.0
    %v438 = vand.u32 %v48, 4294901760
    %439 = vmatpush1.msra.mxu0 %v438
    %440 = vmatprep.subr.mxu0 0.0
    %v441 = vand.u32 %v49, 4294901760
    %442 = vmatpush1.msra.mxu0 %v441
    %443 = vmatprep.subr.mxu0 0.0
    %v444 = vand.u32 %v50, 4294901760
    %445 = vmatpush1.msra.mxu0 %v444
    %446 = vmatprep.subr.mxu0 0.0
    %447 = vmatpush1.msra.mxu0 0.0
    %448 = vmatprep.subr.mxu0 0.0
    %449 = vmatpush1.msra.mxu0 0.0
    %450 = vmatprep.subr.mxu0 0.0
    %451 = vmatpush1.msra.mxu0 0.0
    %452 = vmatprep.subr.mxu0 0.0
    %453 = vmatpush1.msra.mxu0 0.0
    %454 = vmatprep.subr.mxu0 0.0
    %455 = vmatpush1.msra.mxu0 0.0
    %456 = vmatprep.subr.mxu0 0.0
    %457 = vmatpush1.msra.mxu0 0.0
    %458 = vmatprep.subr.mxu0 0.0
    %459 = vmatpush1.msra.mxu0 0.0
    %460 = vmatprep.subr.mxu0 0.0
    %461 = vmatpush1.msra.mxu0 0.0
    %462 = vmatprep.subr.mxu0 0.0
    %463 = vmatpush1.msra.mxu0 0.0
    %464 = vmatprep.subr.mxu0 0.0
    %465 = vmatpush1.msra.mxu0 0.0
    %466 = vmatprep.subr.mxu0 0.0
    %467 = vmatpush1.msra.mxu0 0.0
    %468 = vmatprep.subr.mxu0 0.0
    %469 = vmatpush1.msra.mxu0 0.0
    %470 = vmatprep.subr.mxu0 0.0
    %471 = vmatpush1.msra.mxu0 0.0
    %472 = vmatprep.subr.mxu0 0.0
    %473 = vmatpush1.msra.mxu0 0.0
    %474 = vmatprep.subr.mxu0 0.0
    %475 = vmatpush1.msra.mxu0 0.0
    %476 = vmatprep.subr.mxu0 0.0
    %477 = vmatpush1.msra.mxu0 0.0
    %478 = vmatprep.mubr.f32.mxu0 0.0
    %v479 = vand.u32 %v34, 4294901760
    %v480 = vsub.f32 %v34, %v479
    %v481 = vand.u32 %v480, 4294901760
    %482 = vmatmul.mubr.f32.gmra.mrb[0].mxu0 %v481
    %v483 = vpop.f32.mrb[0].mxu0
    %v484 = vadd.f32 %v395, %v483
    %v485 = vpop.f32.mrb[0].mxu0
    %486 = vdwg.mxu0
    %487 = vmatprep.subr.mxu0 0.0
    %v488 = vand.u32 %v35, 4294901760
    %v489 = vsub.f32 %v35, %v488
    %v490 = vand.u32 %v489, 4294901760
    %491 = vmatpush1.msra.mxu0 %v490
    %492 = vmatprep.subr.mxu0 0.0
    %v493 = vand.u32 %v36, 4294901760
    %v494 = vsub.f32 %v36, %v493
    %v495 = vand.u32 %v494, 4294901760
    %496 = vmatpush1.msra.mxu0 %v495
    %497 = vmatprep.subr.mxu0 0.0
    %v498 = vand.u32 %v37, 4294901760
    %v499 = vsub.f32 %v37, %v498
    %v500 = vand.u32 %v499, 4294901760
    %501 = vmatpush1.msra.mxu0 %v500
    %502 = vmatprep.subr.mxu0 0.0
    %v503 = vand.u32 %v38, 4294901760
    %v504 = vsub.f32 %v38, %v503
    %v505 = vand.u32 %v504, 4294901760
    %506 = vmatpush1.msra.mxu0 %v505
    %507 = vmatprep.subr.mxu0 0.0
    %v508 = vand.u32 %v39, 4294901760
    %v509 = vsub.f32 %v39, %v508
    %v510 = vand.u32 %v509, 4294901760
    %511 = vmatpush1.msra.mxu0 %v510
    %512 = vmatprep.subr.mxu0 0.0
    %v513 = vand.u32 %v40, 4294901760
    %v514 = vsub.f32 %v40, %v513
    %v515 = vand.u32 %v514, 4294901760
    %516 = vmatpush1.msra.mxu0 %v515
    %517 = vmatprep.subr.mxu0 0.0
    %v518 = vand.u32 %v41, 4294901760
    %v519 = vsub.f32 %v41, %v518
    %v520 = vand.u32 %v519, 4294901760
    %521 = vmatpush1.msra.mxu0 %v520
    %522 = vmatprep.subr.mxu0 0.0
    %v523 = vand.u32 %v42, 4294901760
    %v524 = vsub.f32 %v42, %v523
    %v525 = vand.u32 %v524, 4294901760
    %526 = vmatpush1.msra.mxu0 %v525
    %527 = vmatprep.subr.mxu0 0.0
    %v528 = vand.u32 %v43, 4294901760
    %v529 = vsub.f32 %v43, %v528
    %v530 = vand.u32 %v529, 4294901760
    %531 = vmatpush1.msra.mxu0 %v530
    %532 = vmatprep.subr.mxu0 0.0
    %v533 = vand.u32 %v44, 4294901760
    %v534 = vsub.f32 %v44, %v533
    %v535 = vand.u32 %v534, 4294901760
    %536 = vmatpush1.msra.mxu0 %v535
    %537 = vmatprep.subr.mxu0 0.0
    %v538 = vand.u32 %v45, 4294901760
    %v539 = vsub.f32 %v45, %v538
    %v540 = vand.u32 %v539, 4294901760
    %541 = vmatpush1.msra.mxu0 %v540
    %542 = vmatprep.subr.mxu0 0.0
    %v543 = vand.u32 %v46, 4294901760
    %v544 = vsub.f32 %v46, %v543
    %v545 = vand.u32 %v544, 4294901760
    %546 = vmatpush1.msra.mxu0 %v545
    %547 = vmatprep.subr.mxu0 0.0
    %v548 = vand.u32 %v47, 4294901760
    %v549 = vsub.f32 %v47, %v548
    %v550 = vand.u32 %v549, 4294901760
    %551 = vmatpush1.msra.mxu0 %v550
    %552 = vmatprep.subr.mxu0 0.0
    %v553 = vand.u32 %v48, 4294901760
    %v554 = vsub.f32 %v48, %v553
    %v555 = vand.u32 %v554, 4294901760
    %556 = vmatpush1.msra.mxu0 %v555
    %557 = vmatprep.subr.mxu0 0.0
    %v558 = vand.u32 %v49, 4294901760
    %v559 = vsub.f32 %v49, %v558
    %v560 = vand.u32 %v559, 4294901760
    %561 = vmatpush1.msra.mxu0 %v560
    %562 = vmatprep.subr.mxu0 0.0
    %v563 = vand.u32 %v50, 4294901760
    %v564 = vsub.f32 %v50, %v563
    %v565 = vand.u32 %v564, 4294901760
    %566 = vmatpush1.msra.mxu0 %v565
    %567 = vmatprep.subr.mxu0 0.0
    %568 = vmatpush1.msra.mxu0 0.0
    %569 = vmatprep.subr.mxu0 0.0
    %570 = vmatpush1.msra.mxu0 0.0
    %571 = vmatprep.subr.mxu0 0.0
    %572 = vmatpush1.msra.mxu0 0.0
    %573 = vmatprep.subr.mxu0 0.0
    %574 = vmatpush1.msra.mxu0 0.0
    %575 = vmatprep.subr.mxu0 0.0
    %576 = vmatpush1.msra.mxu0 0.0
    %577 = vmatprep.subr.mxu0 0.0
    %578 = vmatpush1.msra.mxu0 0.0
    %579 = vmatprep.subr.mxu0 0.0
    %580 = vmatpush1.msra.mxu0 0.0
    %581 = vmatprep.subr.mxu0 0.0
    %582 = vmatpush1.msra.mxu0 0.0
    %583 = vmatprep.subr.mxu0 0.0
    %584 = vmatpush1.msra.mxu0 0.0
    %585 = vmatprep.subr.mxu0 0.0
    %586 = vmatpush1.msra.mxu0 0.0
    %587 = vmatprep.subr.mxu0 0.0
    %588 = vmatpush1.msra.mxu0 0.0
    %589 = vmatprep.subr.mxu0 0.0
    %590 = vmatpush1.msra.mxu0 0.0
    %591 = vmatprep.subr.mxu0 0.0
    %592 = vmatpush1.msra.mxu0 0.0
    %593 = vmatprep.subr.mxu0 0.0
    %594 = vmatpush1.msra.mxu0 0.0
    %595 = vmatprep.subr.mxu0 0.0
    %596 = vmatpush1.msra.mxu0 0.0
    %597 = vmatprep.subr.mxu0 0.0
    %598 = vmatpush1.msra.mxu0 0.0
    %599 = vmatprep.mubr.f32.mxu0 0.0
    %v600 = vand.u32 %v34, 4294901760
    %601 = vmatmul.mubr.f32.gmra.mrb[0].mxu0 %v600
    %v602 = vpop.f32.mrb[0].mxu0
    %v603 = vadd.f32 %v484, %v602
    %v604 = vpop.f32.mrb[0].mxu0
    %605 = vdwg.mxu0
    %606 = vmatprep.subr.mxu0 0.0
    %v607 = vand.u32 %v35, 4294901760
    %608 = vmatpush1.msra.mxu0 %v607
    %609 = vmatprep.subr.mxu0 0.0
    %v610 = vand.u32 %v36, 4294901760
    %611 = vmatpush1.msra.mxu0 %v610
    %612 = vmatprep.subr.mxu0 0.0
    %v613 = vand.u32 %v37, 4294901760
    %614 = vmatpush1.msra.mxu0 %v613
    %615 = vmatprep.subr.mxu0 0.0
    %v616 = vand.u32 %v38, 4294901760
    %617 = vmatpush1.msra.mxu0 %v616
    %618 = vmatprep.subr.mxu0 0.0
    %v619 = vand.u32 %v39, 4294901760
    %620 = vmatpush1.msra.mxu0 %v619
    %621 = vmatprep.subr.mxu0 0.0
    %v622 = vand.u32 %v40, 4294901760
    %623 = vmatpush1.msra.mxu0 %v622
    %624 = vmatprep.subr.mxu0 0.0
    %v625 = vand.u32 %v41, 4294901760
    %626 = vmatpush1.msra.mxu0 %v625
    %627 = vmatprep.subr.mxu0 0.0
    %v628 = vand.u32 %v42, 4294901760
    %629 = vmatpush1.msra.mxu0 %v628
    %630 = vmatprep.subr.mxu0 0.0
    %v631 = vand.u32 %v43, 4294901760
    %632 = vmatpush1.msra.mxu0 %v631
    %633 = vmatprep.subr.mxu0 0.0
    %v634 = vand.u32 %v44, 4294901760
    %635 = vmatpush1.msra.mxu0 %v634
    %636 = vmatprep.subr.mxu0 0.0
    %v637 = vand.u32 %v45, 4294901760
    %638 = vmatpush1.msra.mxu0 %v637
    %639 = vmatprep.subr.mxu0 0.0
    %v640 = vand.u32 %v46, 4294901760
    %641 = vmatpush1.msra.mxu0 %v640
    %642 = vmatprep.subr.mxu0 0.0
    %v643 = vand.u32 %v47, 4294901760
    %644 = vmatpush1.msra.mxu0 %v643
    %645 = vmatprep.subr.mxu0 0.0
    %v646 = vand.u32 %v48, 4294901760
    %647 = vmatpush1.msra.mxu0 %v646
    %648 = vmatprep.subr.mxu0 0.0
    %v649 = vand.u32 %v49, 4294901760
    %650 = vmatpush1.msra.mxu0 %v649
    %651 = vmatprep.subr.mxu0 0.0
    %v652 = vand.u32 %v50, 4294901760
    %653 = vmatpush1.msra.mxu0 %v652
    %654 = vmatprep.subr.mxu0 0.0
    %655 = vmatpush1.msra.mxu0 0.0
    %656 = vmatprep.subr.mxu0 0.0
    %657 = vmatpush1.msra.mxu0 0.0
    %658 = vmatprep.subr.mxu0 0.0
    %659 = vmatpush1.msra.mxu0 0.0
    %660 = vmatprep.subr.mxu0 0.0
    %661 = vmatpush1.msra.mxu0 0.0
    %662 = vmatprep.subr.mxu0 0.0
    %663 = vmatpush1.msra.mxu0 0.0
    %664 = vmatprep.subr.mxu0 0.0
    %665 = vmatpush1.msra.mxu0 0.0
    %666 = vmatprep.subr.mxu0 0.0
    %667 = vmatpush1.msra.mxu0 0.0
    %668 = vmatprep.subr.mxu0 0.0
    %669 = vmatpush1.msra.mxu0 0.0
    %670 = vmatprep.subr.mxu0 0.0
    %671 = vmatpush1.msra.mxu0 0.0
    %672 = vmatprep.subr.mxu0 0.0
    %673 = vmatpush1.msra.mxu0 0.0
    %674 = vmatprep.subr.mxu0 0.0
    %675 = vmatpush1.msra.mxu0 0.0
    %676 = vmatprep.subr.mxu0 0.0
    %677 = vmatpush1.msra.mxu0 0.0
    %678 = vmatprep.subr.mxu0 0.0
    %679 = vmatpush1.msra.mxu0 0.0
    %680 = vmatprep.subr.mxu0 0.0
    %681 = vmatpush1.msra.mxu0 0.0
    %682 = vmatprep.subr.mxu0 0.0
    %683 = vmatpush1.msra.mxu0 0.0
    %684 = vmatprep.subr.mxu0 0.0
    %685 = vmatpush1.msra.mxu0 0.0
    %686 = vmatprep.mubr.f32.mxu0 0.0
    %v687 = vand.u32 %v34, 4294901760
    %688 = vmatmul.mubr.f32.gmra.mrb[0].mxu0 %v687
    %v689 = vpop.f32.mrb[0].mxu0
    %v690 = vadd.f32 %v603, %v689
    %v691 = vpop.f32.mrb[0].mxu0
    %692 = vdwg.mxu0
    %v693 = vtanh.pop %v690
    %v694 = vld [vmem:[%s3] sm:$0xf]
    %vm695 = vcmask 31744
    %v697 = vsel %vm695, %v693, 0
    %vm699 = vcmask 1043456
    %v701 = vsel %vm699, %v694, 0
    %703 = vmatprep.subr.mxu0 0.0
    %v704 = vand.u32 %v701, 4294901760
    %705 = vmatpush1.msra.mxu0 %v704
    %706 = vmatprep.subr.mxu0 0.0
    %707 = vmatpush1.msra.mxu0 0.0
    %708 = vmatprep.subr.mxu0 0.0
    %709 = vmatpush1.msra.mxu0 0.0
    %710 = vmatprep.subr.mxu0 0.0
    %711 = vmatpush1.msra.mxu0 0.0
    %712 = vmatprep.subr.mxu0 0.0
    %713 = vmatpush1.msra.mxu0 0.0
    %714 = vmatprep.subr.mxu0 0.0
    %715 = vmatpush1.msra.mxu0 0.0
    %716 = vmatprep.subr.mxu0 0.0
    %717 = vmatpush1.msra.mxu0 0.0
    %718 = vmatprep.subr.mxu0 0.0
    %719 = vmatpush1.msra.mxu0 0.0
    %720 = vmatprep.subr.mxu0 0.0
    %721 = vmatpush1.msra.mxu0 0.0
    %722 = vmatprep.subr.mxu0 0.0
    %723 = vmatpush1.msra.mxu0 0.0
    %724 = vmatprep.subr.mxu0 0.0
    %725 = vmatpush1.msra.mxu0 0.0
    %726 = vmatprep.subr.mxu0 0.0
    %727 = vmatpush1.msra.mxu0 0.0
    %728 = vmatprep.subr.mxu0 0.0
    %729 = vmatpush1.msra.mxu0 0.0
    %730 = vmatprep.subr.mxu0 0.0
    %731 = vmatpush1.msra.mxu0 0.0
    %732 = vmatprep.subr.mxu0 0.0
    %733 = vmatpush1.msra.mxu0 0.0
    %734 = vmatprep.subr.mxu0 0.0
    %735 = vmatpush1.msra.mxu0 0.0
    %736 = vmatprep.subr.mxu0 0.0
    %737 = vmatpush1.msra.mxu0 0.0
    %738 = vmatprep.subr.mxu0 0.0
    %739 = vmatpush1.msra.mxu0 0.0
    %740 = vmatprep.subr.mxu0 0.0
    %741 = vmatpush1.msra.mxu0 0.0
    %742 = vmatprep.subr.mxu0 0.0
    %743 = vmatpush1.msra.mxu0 0.0
    %744 = vmatprep.subr.mxu0 0.0
    %745 = vmatpush1.msra.mxu0 0.0
    %746 = vmatprep.subr.mxu0 0.0
    %747 = vmatpush1.msra.mxu0 0.0
    %748 = vmatprep.subr.mxu0 0.0
    %749 = vmatpush1.msra.mxu0 0.0
    %750 = vmatprep.subr.mxu0 0.0
    %751 = vmatpush1.msra.mxu0 0.0
    %752 = vmatprep.subr.mxu0 0.0
    %753 = vmatpush1.msra.mxu0 0.0
    %754 = vmatprep.subr.mxu0 0.0
    %755 = vmatpush1.msra.mxu0 0.0
    %756 = vmatprep.subr.mxu0 0.0
    %757 = vmatpush1.msra.mxu0 0.0
    %758 = vmatprep.subr.mxu0 0.0
    %759 = vmatpush1.msra.mxu0 0.0
    %760 = vmatprep.subr.mxu0 0.0
    %761 = vmatpush1.msra.mxu0 0.0
    %762 = vmatprep.subr.mxu0 0.0
    %763 = vmatpush1.msra.mxu0 0.0
    %764 = vmatprep.subr.mxu0 0.0
    %765 = vmatpush1.msra.mxu0 0.0
    %766 = vmatprep.subr.mxu0 0.0
    %767 = vmatpush1.msra.mxu0 0.0
    %768 = vmatprep.mubr.f32.mxu0 0.0
    %v769 = vand.u32 %v697, 4294901760
    %v770 = vsub.f32 %v697, %v769
    %v771 = vand.u32 %v770, 4294901760
    %v772 = vsub.f32 %v770, %v771
    %v773 = vand.u32 %v772, 4294901760
    %774 = vmatmul.mubr.f32.gmra.mrb[0].mxu0 %v773
    %v775 = vpop.f32.mrb[0].mxu0
    %v776 = vadd.f32 0.0, %v775
    %v777 = vpop.f32.mrb[0].mxu0
    %778 = vdwg.mxu0
    %779 = vmatprep.subr.mxu0 0.0
    %v780 = vand.u32 %v701, 4294901760
    %v781 = vsub.f32 %v701, %v780
    %v782 = vand.u32 %v781, 4294901760
    %v783 = vsub.f32 %v781, %v782
    %v784 = vand.u32 %v783, 4294901760
    %785 = vmatpush1.msra.mxu0 %v784
    %786 = vmatprep.subr.mxu0 0.0
    %787 = vmatpush1.msra.mxu0 0.0
    %788 = vmatprep.subr.mxu0 0.0
    %789 = vmatpush1.msra.mxu0 0.0
    %790 = vmatprep.subr.mxu0 0.0
    %791 = vmatpush1.msra.mxu0 0.0
    %792 = vmatprep.subr.mxu0 0.0
    %793 = vmatpush1.msra.mxu0 0.0
    %794 = vmatprep.subr.mxu0 0.0
    %795 = vmatpush1.msra.mxu0 0.0
    %796 = vmatprep.subr.mxu0 0.0
    %797 = vmatpush1.msra.mxu0 0.0
    %798 = vmatprep.subr.mxu0 0.0
    %799 = vmatpush1.msra.mxu0 0.0
    %800 = vmatprep.subr.mxu0 0.0
    %801 = vmatpush1.msra.mxu0 0.0
    %802 = vmatprep.subr.mxu0 0.0
    %803 = vmatpush1.msra.mxu0 0.0
    %804 = vmatprep.subr.mxu0 0.0
    %805 = vmatpush1.msra.mxu0 0.0
    %806 = vmatprep.subr.mxu0 0.0
    %807 = vmatpush1.msra.mxu0 0.0
    %808 = vmatprep.subr.mxu0 0.0
    %809 = vmatpush1.msra.mxu0 0.0
    %810 = vmatprep.subr.mxu0 0.0
    %811 = vmatpush1.msra.mxu0 0.0
    %812 = vmatprep.subr.mxu0 0.0
    %813 = vmatpush1.msra.mxu0 0.0
    %814 = vmatprep.subr.mxu0 0.0
    %815 = vmatpush1.msra.mxu0 0.0
    %816 = vmatprep.subr.mxu0 0.0
    %817 = vmatpush1.msra.mxu0 0.0
    %818 = vmatprep.subr.mxu0 0.0
    %819 = vmatpush1.msra.mxu0 0.0
    %820 = vmatprep.subr.mxu0 0.0
    %821 = vmatpush1.msra.mxu0 0.0
    %822 = vmatprep.subr.mxu0 0.0
    %823 = vmatpush1.msra.mxu0 0.0
    %824 = vmatprep.subr.mxu0 0.0
    %825 = vmatpush1.msra.mxu0 0.0
    %826 = vmatprep.subr.mxu0 0.0
    %827 = vmatpush1.msra.mxu0 0.0
    %828 = vmatprep.subr.mxu0 0.0
    %829 = vmatpush1.msra.mxu0 0.0
    %830 = vmatprep.subr.mxu0 0.0
    %831 = vmatpush1.msra.mxu0 0.0
    %832 = vmatprep.subr.mxu0 0.0
    %833 = vmatpush1.msra.mxu0 0.0
    %834 = vmatprep.subr.mxu0 0.0
    %835 = vmatpush1.msra.mxu0 0.0
    %836 = vmatprep.subr.mxu0 0.0
    %837 = vmatpush1.msra.mxu0 0.0
    %838 = vmatprep.subr.mxu0 0.0
    %839 = vmatpush1.msra.mxu0 0.0
    %840 = vmatprep.subr.mxu0 0.0
    %841 = vmatpush1.msra.mxu0 0.0
    %842 = vmatprep.subr.mxu0 0.0
    %843 = vmatpush1.msra.mxu0 0.0
    %844 = vmatprep.subr.mxu0 0.0
    %845 = vmatpush1.msra.mxu0 0.0
    %846 = vmatprep.subr.mxu0 0.0
    %847 = vmatpush1.msra.mxu0 0.0
    %848 = vmatprep.mubr.f32.mxu0 0.0
    %v849 = vand.u32 %v697, 4294901760
    %850 = vmatmul.mubr.f32.gmra.mrb[0].mxu0 %v849
    %v851 = vpop.f32.mrb[0].mxu0
    %v852 = vadd.f32 %v776, %v851
    %v853 = vpop.f32.mrb[0].mxu0
    %854 = vdwg.mxu0
    %855 = vmatprep.subr.mxu0 0.0
    %v856 = vand.u32 %v701, 4294901760
    %v857 = vsub.f32 %v701, %v856
    %858 = vmatpush1.msra.mxu0 %v857
    %859 = vmatprep.subr.mxu0 0.0
    %860 = vmatpush1.msra.mxu0 0.0
    %861 = vmatprep.subr.mxu0 0.0
    %862 = vmatpush1.msra.mxu0 0.0
    %863 = vmatprep.subr.mxu0 0.0
    %864 = vmatpush1.msra.mxu0 0.0
    %865 = vmatprep.subr.mxu0 0.0
    %866 = vmatpush1.msra.mxu0 0.0
    %867 = vmatprep.subr.mxu0 0.0
    %868 = vmatpush1.msra.mxu0 0.0
    %869 = vmatprep.subr.mxu0 0.0
    %870 = vmatpush1.msra.mxu0 0.0
    %871 = vmatprep.subr.mxu0 0.0
    %872 = vmatpush1.msra.mxu0 0.0
    %873 = vmatprep.subr.mxu0 0.0
    %874 = vmatpush1.msra.mxu0 0.0
    %875 = vmatprep.subr.mxu0 0.0
    %876 = vmatpush1.msra.mxu0 0.0
    %877 = vmatprep.subr.mxu0 0.0
    %878 = vmatpush1.msra.mxu0 0.0
    %879 = vmatprep.subr.mxu0 0.0
    %880 = vmatpush1.msra.mxu0 0.0
    %881 = vmatprep.subr.mxu0 0.0
    %882 = vmatpush1.msra.mxu0 0.0
    %883 = vmatprep.subr.mxu0 0.0
    %884 = vmatpush1.msra.mxu0 0.0
    %885 = vmatprep.subr.mxu0 0.0
    %886 = vmatpush1.msra.mxu0 0.0
    %887 = vmatprep.subr.mxu0 0.0
    %888 = vmatpush1.msra.mxu0 0.0
    %889 = vmatprep.subr.mxu0 0.0
    %890 = vmatpush1.msra.mxu0 0.0
    %891 = vmatprep.subr.mxu0 0.0
    %892 = vmatpush1.msra.mxu0 0.0
    %893 = vmatprep.subr.mxu0 0.0
    %894 = vmatpush1.msra.mxu0 0.0
    %895 = vmatprep.subr.mxu0 0.0
    %896 = vmatpush1.msra.mxu0 0.0
    %897 = vmatprep.subr.mxu0 0.0
    %898 = vmatpush1.msra.mxu0 0.0
    %899 = vmatprep.subr.mxu0 0.0
    %900 = vmatpush1.msra.mxu0 0.0
    %901 = vmatprep.subr.mxu0 0.0
    %902 = vmatpush1.msra.mxu0 0.0
    %903 = vmatprep.subr.mxu0 0.0
    %904 = vmatpush1.msra.mxu0 0.0
    %905 = vmatprep.subr.mxu0 0.0
    %906 = vmatpush1.msra.mxu0 0.0
    %907 = vmatprep.subr.mxu0 0.0
    %908 = vmatpush1.msra.mxu0 0.0
    %909 = vmatprep.subr.mxu0 0.0
    %910 = vmatpush1.msra.mxu0 0.0
    %911 = vmatprep.subr.mxu0 0.0
    %912 = vmatpush1.msra.mxu0 0.0
    %913 = vmatprep.subr.mxu0 0.0
    %914 = vmatpush1.msra.mxu0 0.0
    %915 = vmatprep.subr.mxu0 0.0
    %916 = vmatpush1.msra.mxu0 0.0
    %917 = vmatprep.subr.mxu0 0.0
    %918 = vmatpush1.msra.mxu0 0.0
    %919 = vmatprep.subr.mxu0 0.0
    %920 = vmatpush1.msra.mxu0 0.0
    %921 = vmatprep.mubr.f32.mxu0 0.0
    %v922 = vand.u32 %v697, 4294901760
    %v923 = vsub.f32 %v697, %v922
    %924 = vmatmul.mubr.f32.gmra.mrb[0].mxu0 %v923
    %v925 = vpop.f32.mrb[0].mxu0
    %v926 = vadd.f32 %v852, %v925
    %v927 = vpop.f32.mrb[0].mxu0
    %928 = vdwg.mxu0
    %929 = vmatprep.subr.mxu0 0.0
    %v930 = vand.u32 %v701, 4294901760
    %931 = vmatpush1.msra.mxu0 %v930
    %932 = vmatprep.subr.mxu0 0.0
    %933 = vmatpush1.msra.mxu0 0.0
    %934 = vmatprep.subr.mxu0 0.0
    %935 = vmatpush1.msra.mxu0 0.0
    %936 = vmatprep.subr.mxu0 0.0
    %937 = vmatpush1.msra.mxu0 0.0
    %938 = vmatprep.subr.mxu0 0.0
    %939 = vmatpush1.msra.mxu0 0.0
    %940 = vmatprep.subr.mxu0 0.0
    %941 = vmatpush1.msra.mxu0 0.0
    %942 = vmatprep.subr.mxu0 0.0
    %943 = vmatpush1.msra.mxu0 0.0
    %944 = vmatprep.subr.mxu0 0.0
    %945 = vmatpush1.msra.mxu0 0.0
    %946 = vmatprep.subr.mxu0 0.0
    %947 = vmatpush1.msra.mxu0 0.0
    %948 = vmatprep.subr.mxu0 0.0
    %949 = vmatpush1.msra.mxu0 0.0
    %950 = vmatprep.subr.mxu0 0.0
    %951 = vmatpush1.msra.mxu0 0.0
    %952 = vmatprep.subr.mxu0 0.0
    %953 = vmatpush1.msra.mxu0 0.0
    %954 = vmatprep.subr.mxu0 0.0
    %955 = vmatpush1.msra.mxu0 0.0
    %956 = vmatprep.subr.mxu0 0.0
    %957 = vmatpush1.msra.mxu0 0.0
    %958 = vmatprep.subr.mxu0 0.0
    %959 = vmatpush1.msra.mxu0 0.0
    %960 = vmatprep.subr.mxu0 0.0
    %961 = vmatpush1.msra.mxu0 0.0
    %962 = vmatprep.subr.mxu0 0.0
    %963 = vmatpush1.msra.mxu0 0.0
    %964 = vmatprep.subr.mxu0 0.0
    %965 = vmatpush1.msra.mxu0 0.0
    %966 = vmatprep.subr.mxu0 0.0
    %967 = vmatpush1.msra.mxu0 0.0
    %968 = vmatprep.subr.mxu0 0.0
    %969 = vmatpush1.msra.mxu0 0.0
    %970 = vmatprep.subr.mxu0 0.0
    %971 = vmatpush1.msra.mxu0 0.0
    %972 = vmatprep.subr.mxu0 0.0
    %973 = vmatpush1.msra.mxu0 0.0
    %974 = vmatprep.subr.mxu0 0.0
    %975 = vmatpush1.msra.mxu0 0.0
    %976 = vmatprep.subr.mxu0 0.0
    %977 = vmatpush1.msra.mxu0 0.0
    %978 = vmatprep.subr.mxu0 0.0
    %979 = vmatpush1.msra.mxu0 0.0
    %980 = vmatprep.subr.mxu0 0.0
    %981 = vmatpush1.msra.mxu0 0.0
    %982 = vmatprep.subr.mxu0 0.0
    %983 = vmatpush1.msra.mxu0 0.0
    %984 = vmatprep.subr.mxu0 0.0
    %985 = vmatpush1.msra.mxu0 0.0
    %986 = vmatprep.subr.mxu0 0.0
    %987 = vmatpush1.msra.mxu0 0.0
    %988 = vmatprep.subr.mxu0 0.0
    %989 = vmatpush1.msra.mxu0 0.0
    %990 = vmatprep.subr.mxu0 0.0
    %991 = vmatpush1.msra.mxu0 0.0
    %992 = vmatprep.subr.mxu0 0.0
    %993 = vmatpush1.msra.mxu0 0.0
    %994 = vmatprep.mubr.f32.mxu0 0.0
    %v995 = vand.u32 %v697, 4294901760
    %v996 = vsub.f32 %v697, %v995
    %v997 = vand.u32 %v996, 4294901760
    %998 = vmatmul.mubr.f32.gmra.mrb[0].mxu0 %v997
    %v999 = vpop.f32.mrb[0].mxu0
    %v1000 = vadd.f32 %v926, %v999
    %v1001 = vpop.f32.mrb[0].mxu0
    %1002 = vdwg.mxu0
    %1003 = vmatprep.subr.mxu0 0.0
    %v1004 = vand.u32 %v701, 4294901760
    %v1005 = vsub.f32 %v701, %v1004
    %v1006 = vand.u32 %v1005, 4294901760
    %1007 = vmatpush1.msra.mxu0 %v1006
    %1008 = vmatprep.subr.mxu0 0.0
    %1009 = vmatpush1.msra.mxu0 0.0
    %1010 = vmatprep.subr.mxu0 0.0
    %1011 = vmatpush1.msra.mxu0 0.0
    %1012 = vmatprep.subr.mxu0 0.0
    %1013 = vmatpush1.msra.mxu0 0.0
    %1014 = vmatprep.subr.mxu0 0.0
    %1015 = vmatpush1.msra.mxu0 0.0
    %1016 = vmatprep.subr.mxu0 0.0
    %1017 = vmatpush1.msra.mxu0 0.0
    %1018 = vmatprep.subr.mxu0 0.0
    %1019 = vmatpush1.msra.mxu0 0.0
    %1020 = vmatprep.subr.mxu0 0.0
    %1021 = vmatpush1.msra.mxu0 0.0
    %1022 = vmatprep.subr.mxu0 0.0
    %1023 = vmatpush1.msra.mxu0 0.0
    %1024 = vmatprep.subr.mxu0 0.0
    %1025 = vmatpush1.msra.mxu0 0.0
    %1026 = vmatprep.subr.mxu0 0.0
    %1027 = vmatpush1.msra.mxu0 0.0
    %1028 = vmatprep.subr.mxu0 0.0
    %1029 = vmatpush1.msra.mxu0 0.0
    %1030 = vmatprep.subr.mxu0 0.0
    %1031 = vmatpush1.msra.mxu0 0.0
    %1032 = vmatprep.subr.mxu0 0.0
    %1033 = vmatpush1.msra.mxu0 0.0
    %1034 = vmatprep.subr.mxu0 0.0
    %1035 = vmatpush1.msra.mxu0 0.0
    %1036 = vmatprep.subr.mxu0 0.0
    %1037 = vmatpush1.msra.mxu0 0.0
    %1038 = vmatprep.subr.mxu0 0.0
    %1039 = vmatpush1.msra.mxu0 0.0
    %1040 = vmatprep.subr.mxu0 0.0
    %1041 = vmatpush1.msra.mxu0 0.0
    %1042 = vmatprep.subr.mxu0 0.0
    %1043 = vmatpush1.msra.mxu0 0.0
    %1044 = vmatprep.subr.mxu0 0.0
    %1045 = vmatpush1.msra.mxu0 0.0
    %1046 = vmatprep.subr.mxu0 0.0
    %1047 = vmatpush1.msra.mxu0 0.0
    %1048 = vmatprep.subr.mxu0 0.0
    %1049 = vmatpush1.msra.mxu0 0.0
    %1050 = vmatprep.subr.mxu0 0.0
    %1051 = vmatpush1.msra.mxu0 0.0
    %1052 = vmatprep.subr.mxu0 0.0
    %1053 = vmatpush1.msra.mxu0 0.0
    %1054 = vmatprep.subr.mxu0 0.0
    %1055 = vmatpush1.msra.mxu0 0.0
    %1056 = vmatprep.subr.mxu0 0.0
    %1057 = vmatpush1.msra.mxu0 0.0
    %1058 = vmatprep.subr.mxu0 0.0
    %1059 = vmatpush1.msra.mxu0 0.0
    %1060 = vmatprep.subr.mxu0 0.0
    %1061 = vmatpush1.msra.mxu0 0.0
    %1062 = vmatprep.subr.mxu0 0.0
    %1063 = vmatpush1.msra.mxu0 0.0
    %1064 = vmatprep.subr.mxu0 0.0
    %1065 = vmatpush1.msra.mxu0 0.0
    %1066 = vmatprep.subr.mxu0 0.0
    %1067 = vmatpush1.msra.mxu0 0.0
    %1068 = vmatprep.subr.mxu0 0.0
    %1069 = vmatpush1.msra.mxu0 0.0
    %1070 = vmatprep.mubr.f32.mxu0 0.0
    %v1071 = vand.u32 %v697, 4294901760
    %1072 = vmatmul.mubr.f32.gmra.mrb[0].mxu0 %v1071
    %v1073 = vpop.f32.mrb[0].mxu0
    %v1074 = vadd.f32 %v1000, %v1073
    %v1075 = vpop.f32.mrb[0].mxu0
    %1076 = vdwg.mxu0
    %1077 = vmatprep.subr.mxu0 0.0
    %v1078 = vand.u32 %v701, 4294901760
    %1079 = vmatpush1.msra.mxu0 %v1078
    %1080 = vmatprep.subr.mxu0 0.0
    %1081 = vmatpush1.msra.mxu0 0.0
    %1082 = vmatprep.subr.mxu0 0.0
    %1083 = vmatpush1.msra.mxu0 0.0
    %1084 = vmatprep.subr.mxu0 0.0
    %1085 = vmatpush1.msra.mxu0 0.0
    %1086 = vmatprep.subr.mxu0 0.0
    %1087 = vmatpush1.msra.mxu0 0.0
    %1088 = vmatprep.subr.mxu0 0.0
    %1089 = vmatpush1.msra.mxu0 0.0
    %1090 = vmatprep.subr.mxu0 0.0
    %1091 = vmatpush1.msra.mxu0 0.0
    %1092 = vmatprep.subr.mxu0 0.0
    %1093 = vmatpush1.msra.mxu0 0.0
    %1094 = vmatprep.subr.mxu0 0.0
    %1095 = vmatpush1.msra.mxu0 0.0
    %1096 = vmatprep.subr.mxu0 0.0
    %1097 = vmatpush1.msra.mxu0 0.0
    %1098 = vmatprep.subr.mxu0 0.0
    %1099 = vmatpush1.msra.mxu0 0.0
    %1100 = vmatprep.subr.mxu0 0.0
    %1101 = vmatpush1.msra.mxu0 0.0
    %1102 = vmatprep.subr.mxu0 0.0
    %1103 = vmatpush1.msra.mxu0 0.0
    %1104 = vmatprep.subr.mxu0 0.0
    %1105 = vmatpush1.msra.mxu0 0.0
    %1106 = vmatprep.subr.mxu0 0.0
    %1107 = vmatpush1.msra.mxu0 0.0
    %1108 = vmatprep.subr.mxu0 0.0
    %1109 = vmatpush1.msra.mxu0 0.0
    %1110 = vmatprep.subr.mxu0 0.0
    %1111 = vmatpush1.msra.mxu0 0.0
    %1112 = vmatprep.subr.mxu0 0.0
    %1113 = vmatpush1.msra.mxu0 0.0
    %1114 = vmatprep.subr.mxu0 0.0
    %1115 = vmatpush1.msra.mxu0 0.0
    %1116 = vmatprep.subr.mxu0 0.0
    %1117 = vmatpush1.msra.mxu0 0.0
    %1118 = vmatprep.subr.mxu0 0.0
    %1119 = vmatpush1.msra.mxu0 0.0
    %1120 = vmatprep.subr.mxu0 0.0
    %1121 = vmatpush1.msra.mxu0 0.0
    %1122 = vmatprep.subr.mxu0 0.0
    %1123 = vmatpush1.msra.mxu0 0.0
    %1124 = vmatprep.subr.mxu0 0.0
    %1125 = vmatpush1.msra.mxu0 0.0
    %1126 = vmatprep.subr.mxu0 0.0
    %1127 = vmatpush1.msra.mxu0 0.0
    %1128 = vmatprep.subr.mxu0 0.0
    %1129 = vmatpush1.msra.mxu0 0.0
    %1130 = vmatprep.subr.mxu0 0.0
    %1131 = vmatpush1.msra.mxu0 0.0
    %1132 = vmatprep.subr.mxu0 0.0
    %1133 = vmatpush1.msra.mxu0 0.0
    %1134 = vmatprep.subr.mxu0 0.0
    %1135 = vmatpush1.msra.mxu0 0.0
    %1136 = vmatprep.subr.mxu0 0.0
    %1137 = vmatpush1.msra.mxu0 0.0
    %1138 = vmatprep.subr.mxu0 0.0
    %1139 = vmatpush1.msra.mxu0 0.0
    %1140 = vmatprep.subr.mxu0 0.0
    %1141 = vmatpush1.msra.mxu0 0.0
    %1142 = vmatprep.mubr.f32.mxu0 0.0
    %v1143 = vand.u32 %v697, 4294901760
    %1144 = vmatmul.mubr.f32.gmra.mrb[0].mxu0 %v1143
    %v1145 = vpop.f32.mrb[0].mxu0
    %v1146 = vadd.f32 %v1074, %v1145
    %v1147 = vpop.f32.mrb[0].mxu0
    %1148 = vdwg.mxu0
    %v1149 = vadd.f32 %v34, %v1146
    %1150 = vst [vmem:[%s4] sm:$0xff] %v1149
    %v1151 = vmul.f32 %v693, %v693
    %v1152 = vsub.f32 1.0, %v1151
    %v1153 = vstv %s33
    %v1154 = vmul.f32 %v1153, %v1152
    %v1155 = vadd.f32 %v1154, 1.0
    %v1156 = vand.u32 2147483647, %v1155
    %v1157 = vlog2.pop %v1156
    %v1158 = vmul.f32 %v1157, 0.6931472
    %1159 = vst.msk [vmem:[%s5] sm:$0xff] %vm695, %v1158
    // Predicated region
    $region22: #{planar_flow_forward.1} parent=1 // pred_check
      _
    $region23: #{planar_flow_forward.1} parent=1 // pred_check_branch
      %1161 = sbr.rel (0) target = $region25
    $region24: #{planar_flow_forward.1} parent=1 // pred_region
      _
    $region25: #{planar_flow_forward.1} parent=1 // pred_fallthru
      _
    // Predicated region
    $region26: #{planar_flow_forward.1} parent=1 // pred_check
      _
    $region27: #{planar_flow_forward.1} parent=1 // pred_check_branch
      %1163 = sbr.rel (0) target = $region29
    $region28: #{planar_flow_forward.1} parent=1 // pred_region
      _
    $region29: #{planar_flow_forward.1} parent=1 // pred_fallthru
      _
    // Predicated region
    $region30: #{planar_flow_forward.1} parent=1 // pred_check
      _
    $region31: #{planar_flow_forward.1} parent=1 // pred_check_branch
      %1165 = sbr.rel (0) target = $region33
    $region32: #{planar_flow_forward.1} parent=1 // pred_region
      _
    $region33: #{planar_flow_forward.1} parent=1 // pred_fallthru
      _
    // Predicated region
    $region34: #{planar_flow_forward.1} parent=1 // pred_check
      _
    $region35: #{planar_flow_forward.1} parent=1 // pred_check_branch
      %1167 = sbr.rel (0) target = $region37
    $region36: #{planar_flow_forward.1} parent=1 // pred_region
      _
    $region37: #{planar_flow_forward.1} parent=1 // pred_fallthru
      _
    %1168 = vsyncpa [#allocation3], 1

</llo_original>
